<compile_context>
chip_gen: v7x
topology: tpu7x:2x2x1
jax: 0.10.0
libtpu: 0.0.40
codegen_flags: <defaults>
</compile_context>

<pallas_src>
import functools

import jax
import jax.numpy as jnp
from jax.experimental import pallas as pl
from jax.experimental.pallas import tpu as pltpu


# ------------------------------------------------------------------ kernels


def spmm_relu_proj_kernel(a_ref, xw_ref, b_ref, wn_ref, o_ref, acc_ref, *, tk):
    # acc[i-tile] += A[i-tile, k-tile] @ XW[k-tile]  over the LAST ("arbitrary")
    # grid axis; finalize with relu(acc + b) @ W_next -> bf16, feeds next layer.
    k = pl.program_id(1)

    @pl.when(k == 0)
    def _():
        acc_ref[...] = jnp.zeros_like(acc_ref)

    k_start = pl.multiple_of(k * tk, tk)
    xw = xw_ref[pl.ds(k_start, tk), :]            # XW is fully VMEM-resident
    acc_ref[...] += jnp.dot(a_ref[...], xw, preferred_element_type=jnp.float32)

    @pl.when(k == pl.num_programs(1) - 1)
    def _():
        h = jnp.maximum(acc_ref[...] + b_ref[...], 0.0).astype(jnp.bfloat16)
        # TODO(synk): F.dropout(p=0.5, training=True) omitted (identity in eval mode)
        o_ref[...] = jnp.dot(
            h, wn_ref[...], preferred_element_type=jnp.float32
        ).astype(o_ref.dtype)


def spmm_relu_classify_kernel(a_ref, xw_ref, b_ref, wc_ref, bc_ref, o_ref,
                              acc_ref, *, tk):
    # Same accumulation; finalize = relu -> classifier -> log_softmax on a
    # 128-lane padded tile (lane-dense output store).
    k = pl.program_id(1)

    @pl.when(k == 0)
    def _():
        acc_ref[...] = jnp.zeros_like(acc_ref)

    k_start = pl.multiple_of(k * tk, tk)
    xw = xw_ref[pl.ds(k_start, tk), :]
    acc_ref[...] += jnp.dot(a_ref[...], xw, preferred_element_type=jnp.float32)

    @pl.when(k == pl.num_programs(1) - 1)
    def _():
        h = jnp.maximum(acc_ref[...] + b_ref[...], 0.0).astype(jnp.bfloat16)
        # Padded class lanes of bc_ref hold -1e30 (finite sentinel, NOT -inf), so
        # they never win the max and exp-underflow to 0 -> softmax over the real
        # classes is exact and no NaNs appear on padded lanes.
        logits = (
            jnp.dot(h, wc_ref[...], preferred_element_type=jnp.float32)
            + bc_ref[...]
        )
        m = jnp.max(logits, axis=1, keepdims=True)
        z = logits - m
        lse = jnp.log(jnp.sum(jnp.exp(z), axis=1, keepdims=True))
        o_ref[...] = z - lse


# ------------------------------------------------------------------ helpers


def _round_up(x, m):
    return ((x + m - 1) // m) * m


def _tiles_for(n):
    """Pick (N_pad, TM, TK): TM multiple of 8, TK multiple of 128, both dividing
    N_pad.  Large graphs get 2-4 MiB bf16 A blocks (TM=512, TK up to 4096) so the
    per-step DMA amortizes the ~0.35us grid-step overhead; small graphs use the
    full extent.  Row grid is kept >= 2 when possible for v7x megacore sharding."""
    if n <= 1024:
        n_pad = _round_up(n, 128)
        tm = min(n_pad, 512)
        if n_pad >= 256:
            tm = min(tm, n_pad // 2)      # grid[0] >= 2 -> shard across 2 TCs
        return n_pad, tm, n_pad
    n_pad = _round_up(n, 512)
    tm = 512
    tk = 512
    for cand in (4096, 2048, 1024, 512):
        if n_pad % cand == 0:
            tk = cand
            break
    return n_pad, tm, tk


def build_norm_adj(edge_index, num_nodes, n_pad):
    """Dense D^{-1/2}(A + I)D^{-1/2}, matching torch_geometric's GCNConv
    (add_self_loops=True, normalize=True, unit edge weights), zero-padded to
    [n_pad, n_pad] and cast to bf16 to halve the dominant HBM stream."""
    src, dst = edge_index[0], edge_index[1]
    loop = jnp.arange(num_nodes, dtype=edge_index.dtype)
    src = jnp.concatenate([src, loop])
    dst = jnp.concatenate([dst, loop])
    deg = jnp.zeros((num_nodes,), jnp.float32).at[dst].add(1.0)
    dinv = jnp.where(deg > 0, 1.0 / jnp.sqrt(deg), 0.0)
    norm = dinv[src] * dinv[dst]
    a_hat = jnp.zeros((n_pad, n_pad), jnp.float32).at[dst, src].add(norm)
    # TODO(synk): for large/sparse graphs this dense A_hat should become a
    # block-sparse SpMM (scalar-prefetched nonzero-tile lists + data-dependent
    # index_map); dense form kept for this demo size.
    return a_hat.astype(jnp.bfloat16)


# ------------------------------------------------------------------ pallas wrappers


_VMEM_LIMIT = 48 * 1024 * 1024   # <= v7x's 64 MiB physical; plenty on v5e/v6e


def _spmm_relu_proj(a, xw, b, w_next, tm, tk):
    n_pad = a.shape[0]
    hp = xw.shape[1]
    grid = (n_pad // tm, n_pad // tk)
    flops = 2 * n_pad * n_pad * hp + 2 * n_pad * hp * hp
    bytes_accessed = int(
        a.size * a.dtype.itemsize      # A streamed exactly once
        + xw.size * 2                  # XW resident: one DMA
        + n_pad * hp * 2               # bf16 output writeback
    )
    return pl.pallas_call(
        functools.partial(spmm_relu_proj_kernel, tk=tk),
        out_shape=jax.ShapeDtypeStruct((n_pad, hp), jnp.bfloat16),
        grid_spec=pltpu.PrefetchScalarGridSpec(
            num_scalar_prefetch=0,
            grid=grid,
            in_specs=[
                pl.BlockSpec((tm, tk), lambda i, k: (i, k)),       # A stream
                pl.BlockSpec((n_pad, hp), lambda i, k: (0, 0)),    # XW resident
                pl.BlockSpec((1, hp), lambda i, k: (0, 0)),        # bias
                pl.BlockSpec((hp, hp), lambda i, k: (0, 0)),       # next-layer W
            ],
            out_specs=pl.BlockSpec((tm, hp), lambda i, k: (i, 0)),
            scratch_shapes=[pltpu.VMEM((tm, hp), jnp.float32)],
        ),
        compiler_params=pltpu.CompilerParams(
            dimension_semantics=("parallel", "arbitrary"),
            vmem_limit_bytes=_VMEM_LIMIT,
        ),
        cost_estimate=pl.CostEstimate(
            flops=flops, transcendentals=0, bytes_accessed=bytes_accessed
        ),
    )(a, xw, b, w_next)


def _spmm_relu_classify(a, xw, b, wc_pad, bc_pad, tm, tk):
    n_pad = a.shape[0]
    hp = xw.shape[1]
    c_pad = wc_pad.shape[1]
    grid = (n_pad // tm, n_pad // tk)
    flops = 2 * n_pad * n_pad * hp + 2 * n_pad * hp * c_pad
    bytes_accessed = int(
        a.size * a.dtype.itemsize
        + xw.size * 2
        + n_pad * c_pad * 4
    )
    return pl.pallas_call(
        functools.partial(spmm_relu_classify_kernel, tk=tk),
        out_shape=jax.ShapeDtypeStruct((n_pad, c_pad), jnp.float32),
        grid_spec=pltpu.PrefetchScalarGridSpec(
            num_scalar_prefetch=0,
            grid=grid,
            in_specs=[
                pl.BlockSpec((tm, tk), lambda i, k: (i, k)),       # A stream
                pl.BlockSpec((n_pad, hp), lambda i, k: (0, 0)),    # XW resident
                pl.BlockSpec((1, hp), lambda i, k: (0, 0)),        # bias
                pl.BlockSpec((hp, c_pad), lambda i, k: (0, 0)),    # classifier W
                pl.BlockSpec((1, c_pad), lambda i, k: (0, 0)),     # classifier b
            ],
            out_specs=pl.BlockSpec((tm, c_pad), lambda i, k: (i, 0)),
            scratch_shapes=[pltpu.VMEM((tm, hp), jnp.float32)],
        ),
        compiler_params=pltpu.CompilerParams(
            dimension_semantics=("parallel", "arbitrary"),
            vmem_limit_bytes=_VMEM_LIMIT,
        ),
        cost_estimate=pl.CostEstimate(
            flops=flops,
            transcendentals=n_pad * (c_pad + 1),
            bytes_accessed=bytes_accessed,
        ),
    )(a, xw, b, wc_pad, bc_pad)


# ------------------------------------------------------------------ forward


def gcn_forward(x, edge_index, params):
    n, f = x.shape
    w1, b1, w2, b2, wc, bc = params
    h = w1.shape[1]
    c = wc.shape[1]

    n_pad, tm, tk = _tiles_for(n)
    hp = max(128, _round_up(h, 128))      # lane-dense hidden dim
    c_pad = 128                           # lane-dense classifier output

    # --- plain-JAX glue: normalized adjacency + 128-lane padded weights ---
    a_hat = build_norm_adj(edge_index, n, n_pad)                  # [n_pad, n_pad] bf16
    x_pad = jnp.zeros((n_pad, f), jnp.float32).at[:n].set(x)

    w1_pad = jnp.zeros((f, hp), jnp.float32).at[:, :h].set(w1)
    b1_pad = jnp.zeros((1, hp), jnp.float32).at[0, :h].set(b1)
    w2_pad = (
        jnp.zeros((hp, hp), jnp.float32).at[:h, :h].set(w2).astype(jnp.bfloat16)
    )
    b2_pad = jnp.zeros((1, hp), jnp.float32).at[0, :h].set(b2)
    wc_pad = (
        jnp.zeros((hp, c_pad), jnp.float32).at[:h, :c].set(wc).astype(jnp.bfloat16)
    )
    bc_pad = jnp.full((1, c_pad), -1e30, jnp.float32).at[0, :c].set(bc)

    # P1 = x @ W1 is a tiny (N x f) @ (f x 128) matmul -> plain XLA dot (bf16 result).
    p1 = jnp.dot(x_pad, w1_pad).astype(jnp.bfloat16)              # [n_pad, hp]

    # relu(A @ P1 + b1) @ W2  (fused epilogue, bf16 lane-dense output)
    p2 = _spmm_relu_proj(a_hat, p1, b1_pad, w2_pad, tm, tk)       # [n_pad, hp]

    # log_softmax(relu(A @ P2 + b2) @ Wc + bc)  on a 128-lane padded tile
    out_pad = _spmm_relu_classify(a_hat, p2, b2_pad, wc_pad, bc_pad, tm, tk)
    return out_pad[:n, :c]


def init_params(key, num_node_features, hidden_channels, num_classes=2):
    k1, k2, k3, k4 = jax.random.split(key, 4)

    def glorot(k, shape):
        limit = jnp.sqrt(6.0 / (shape[0] + shape[1]))
        return jax.random.uniform(k, shape, jnp.float32, -limit, limit)

    # GCNConv: glorot weights, zero bias (torch_geometric default)
    w1 = glorot(k1, (num_node_features, hidden_channels))
    b1 = jnp.zeros((hidden_channels,), jnp.float32)
    w2 = glorot(k2, (hidden_channels, hidden_channels))
    b2 = jnp.zeros((hidden_channels,), jnp.float32)
    # nn.Linear(hidden, 2): uniform(-1/sqrt(fan_in), 1/sqrt(fan_in))
    bound = 1.0 / jnp.sqrt(jnp.float32(hidden_channels))
    wc = jax.random.uniform(
        k3, (hidden_channels, num_classes), jnp.float32, -bound, bound
    )
    bc = jax.random.uniform(k4, (num_classes,), jnp.float32, -bound, bound)
    return (w1, b1, w2, b2, wc, bc)


if __name__ == "__main__":
    key = jax.random.PRNGKey(0)
    k_x, k_p = jax.random.split(key)

    num_nodes = 16
    num_node_features = 4
    hidden_channels = 32

    # deterministic node features
    x = jax.random.normal(k_x, (num_nodes, num_node_features), jnp.float32)

    # deterministic undirected ring graph: edges in both directions -> [2, 32]
    i = jnp.arange(num_nodes, dtype=jnp.int32)
    j = (i + 1) % num_nodes
    edge_index = jnp.stack(
        [jnp.concatenate([i, j]), jnp.concatenate([j, i])], axis=0
    )

    params = init_params(k_p, num_node_features, hidden_channels)

    out = gcn_forward(x, edge_index, params)
    out = jax.block_until_ready(out)

    assert out.shape == (num_nodes, 2)
    # rows of log_softmax must exp-sum to 1
    assert jnp.allclose(jnp.sum(jnp.exp(out), axis=1), 1.0, atol=1e-4)
    print("KERNEL_OK")
</pallas_src>

<mosaic_0001>
module attributes {stable_mosaic.version = 11 : i64} {
  func.func @spmm_relu_proj_kernel(%arg0: i32, %arg1: i32, %arg2: memref<128x128xbf16, #tpu.memory_space<vmem>>, %arg3: memref<128x128xbf16, #tpu.memory_space<vmem>>, %arg4: memref<1x128xf32, #tpu.memory_space<vmem>>, %arg5: memref<128x128xbf16, #tpu.memory_space<vmem>>, %arg6: memref<128x128xbf16, #tpu.memory_space<vmem>>, %arg7: memref<128x128xf32, #tpu.memory_space<vmem>>) attributes {dimension_semantics = [#tpu.dimension_semantics<parallel>, #tpu.dimension_semantics<arbitrary>], iteration_bounds = array<i64: 1, 1>, scalar_prefetch = 0 : i64, scratch_operands = 1 : i64, tpu.core_type = #tpu.core_type<tc>, window_params = [{transform_indices = @transform_0, window_bounds = array<i64: 128, 128>}, {pipeline_mode = #tpu.pipeline_mode<synchronous>, transform_indices = @transform_1, window_bounds = array<i64: 128, 128>}, {pipeline_mode = #tpu.pipeline_mode<synchronous>, transform_indices = @transform_2, window_bounds = array<i64: 1, 128>}, {pipeline_mode = #tpu.pipeline_mode<synchronous>, transform_indices = @transform_3, window_bounds = array<i64: 128, 128>}, {transform_indices = @transform_4, window_bounds = array<i64: 128, 128>}]} {
    %c0_i32 = arith.constant 0 : i32
    %0 = arith.cmpi eq, %arg1, %c0_i32 : i32
    %1 = arith.extui %0 : i1 to i32
    %c0_i32_0 = arith.constant 0 : i32
    %2 = arith.cmpi ne, %1, %c0_i32_0 : i32
    scf.if %2 {
      %cst_9 = arith.constant 0.000000e+00 : f32
      %15 = vector.broadcast %cst_9 : f32 to vector<128x128xf32>
      %c0_10 = arith.constant 0 : index
      %c0_11 = arith.constant 0 : index
      %16 = vector.load %arg7[%c0_10, %c0_11] : memref<128x128xf32, #tpu.memory_space<vmem>>, vector<128x128xf32>
      tpu.vector_store %arg7[%c0_10, %c0_11], %15 {strides = array<i32>} : memref<128x128xf32, #tpu.memory_space<vmem>>, vector<128x128xf32>,
    } else {
    }
    %c128_i32 = arith.constant 128 : i32
    %3 = arith.muli %arg1, %c128_i32 : i32
    %4 = tpu.assume_multiple %3, 128 : i32
    %5 = arith.index_cast %4 : i32 to index
    %c0 = arith.constant 0 : index
    %6 = vector.load %arg3[%5, %c0] : memref<128x128xbf16, #tpu.memory_space<vmem>>, vector<128x128xbf16>
    %c0_1 = arith.constant 0 : index
    %c0_2 = arith.constant 0 : index
    %7 = vector.load %arg7[%c0_1, %c0_2] : memref<128x128xf32, #tpu.memory_space<vmem>>, vector<128x128xf32>
    %c0_3 = arith.constant 0 : index
    %c0_4 = arith.constant 0 : index
    %8 = vector.load %arg2[%c0_3, %c0_4] : memref<128x128xbf16, #tpu.memory_space<vmem>>, vector<128x128xbf16>
    %cst = arith.constant dense<0.000000e+00> : vector<128x128xf32>
    %9 = tpu.matmul %8, %6, %cst {dimension_numbers = #tpu.dot_dimension_numbers<[1], [0], [0], [1], [0, 0, 1, 1], [], []>} : vector<128x128xbf16>, vector<128x128xbf16>, vector<128x128xf32> -> vector<128x128xf32>
    %10 = arith.addf %7, %9 : vector<128x128xf32>
    %c0_5 = arith.constant 0 : index
    %c0_6 = arith.constant 0 : index
    %11 = vector.load %arg7[%c0_5, %c0_6] : memref<128x128xf32, #tpu.memory_space<vmem>>, vector<128x128xf32>
    tpu.vector_store %arg7[%c0_5, %c0_6], %10 {strides = array<i32>} : memref<128x128xf32, #tpu.memory_space<vmem>>, vector<128x128xf32>,
    %c0_i32_7 = arith.constant 0 : i32
    %12 = arith.cmpi eq, %arg1, %c0_i32_7 : i32
    %13 = arith.extui %12 : i1 to i32
    %c0_i32_8 = arith.constant 0 : i32
    %14 = arith.cmpi ne, %13, %c0_i32_8 : i32
    scf.if %14 {
      %c0_9 = arith.constant 0 : index
      %c0_10 = arith.constant 0 : index
      %15 = vector.load %arg7[%c0_9, %c0_10] : memref<128x128xf32, #tpu.memory_space<vmem>>, vector<128x128xf32>
      %c0_11 = arith.constant 0 : index
      %c0_12 = arith.constant 0 : index
      %16 = vector.load %arg4[%c0_11, %c0_12] : memref<1x128xf32, #tpu.memory_space<vmem>>, vector<1x128xf32>
      %17 = vector.broadcast %16 : vector<1x128xf32> to vector<128x128xf32>
      %18 = arith.addf %15, %17 : vector<128x128xf32>
      %cst_13 = arith.constant 0.000000e+00 : f32
      %19 = vector.broadcast %cst_13 : f32 to vector<128x128xf32>
      %20 = arith.maximumf %18, %19 : vector<128x128xf32>
      %21 = arith.truncf %20 : vector<128x128xf32> to vector<128x128xbf16>
      %c0_14 = arith.constant 0 : index
      %c0_15 = arith.constant 0 : index
      %22 = vector.load %arg5[%c0_14, %c0_15] : memref<128x128xbf16, #tpu.memory_space<vmem>>, vector<128x128xbf16>
      %cst_16 = arith.constant dense<0.000000e+00> : vector<128x128xf32>
      %23 = tpu.matmul %21, %22, %cst_16 {dimension_numbers = #tpu.dot_dimension_numbers<[1], [0], [0], [1], [0, 0, 1, 1], [], []>} : vector<128x128xbf16>, vector<128x128xbf16>, vector<128x128xf32> -> vector<128x128xf32>
      %24 = arith.truncf %23 : vector<128x128xf32> to vector<128x128xbf16>
      %c0_17 = arith.constant 0 : index
      %c0_18 = arith.constant 0 : index
      %25 = vector.load %arg6[%c0_17, %c0_18] : memref<128x128xbf16, #tpu.memory_space<vmem>>, vector<128x128xbf16>
      tpu.vector_store %arg6[%c0_17, %c0_18], %24 {strides = array<i32>} : memref<128x128xbf16, #tpu.memory_space<vmem>>, vector<128x128xbf16>,
    } else {
    }
    return
  }
  func.func @transform_0(%arg0: i32, %arg1: i32) -> (i32, i32) {
    %c0_i32 = arith.constant 0 : i32
    return %arg0, %arg1 : i32, i32
  }
  func.func @transform_1(%arg0: i32, %arg1: i32) -> (i32, i32) {
    %c0_i32 = arith.constant 0 : i32
    %c0_i32_0 = arith.constant 0 : i32
    %c0_i32_1 = arith.constant 0 : i32
    return %c0_i32, %c0_i32_0 : i32, i32
  }
  func.func @transform_2(%arg0: i32, %arg1: i32) -> (i32, i32) {
    %c0_i32 = arith.constant 0 : i32
    %c0_i32_0 = arith.constant 0 : i32
    %c0_i32_1 = arith.constant 0 : i32
    return %c0_i32, %c0_i32_0 : i32, i32
  }
  func.func @transform_3(%arg0: i32, %arg1: i32) -> (i32, i32) {
    %c0_i32 = arith.constant 0 : i32
    %c0_i32_0 = arith.constant 0 : i32
    %c0_i32_1 = arith.constant 0 : i32
    return %c0_i32, %c0_i32_0 : i32, i32
  }
  func.func @transform_4(%arg0: i32, %arg1: i32) -> (i32, i32) {
    %c0_i32 = arith.constant 0 : i32
    %c0_i32_0 = arith.constant 0 : i32
    return %arg0, %c0_i32 : i32, i32
  }
}

</mosaic_0001>

<llo_original>
// kernel: tpu_custom_call.1
$region0: #{tpu_custom_call.1}
  #allocation0 [shape = 'u32[]', space=smem, size = 0x4, offset = 0x4, fixed_abs, tag = 'smem constant byte address 0x4 - core index']
  #allocation1 [shape = 'u32[144,128]{1,0:T(1,128)}', space=vmem, size = 0x12000, scoped, tag = 'internal scratch']
  #allocation2 [shape = 'f32[128,128]{1,0:T(8,128)}', space=vmem, size = 0x10000, scoped, tag = 'scratch operand']
  %s0 = inlined_call_operand.hbm [shape: bf16[128,128], index: 0, kind: input, shape index: {}]
  %s1 = inlined_call_operand.hbm [shape: bf16[128,128], index: 1, kind: input, shape index: {}]
  %s2 = inlined_call_operand.vmem [shape: f32[1,128], index: 2, kind: input, shape index: {}]
  %s3 = inlined_call_operand.hbm [shape: bf16[128,128], index: 3, kind: input, shape index: {}]
  %s4 = inlined_call_operand.hbm [shape: bf16[128,128], index: 4, kind: output, shape index: {}]
  %s5 = sld [smem:[#allocation0]]
  $region46: #{tpu_custom_call.1} parent=0
    _
  %s7 = ssub.s32 1, %s5
  %s8 = scalar_select 0, %s7, %s5
  $region1: #{tpu_custom_call.1} parent=0
    #allocation3 [shape = 'u8[32768]{0}', space=vmem, size = 0x8000, scoped, tag = 'input window, operand 0, single buffered']
    #allocation4 [shape = 's32[1]{0}', space=sflag, size = 0x4, scoped, tag = 'scoped memory for tpu_custom_call.1']
    #allocation5 [shape = 's32[1]{0}', space=sflag, size = 0x4, scoped, tag = 'scoped memory for tpu_custom_call.1']
    #allocation6 [shape = 'u8[32768]{0}', space=vmem, size = 0x8000, scoped, tag = 'input window, operand 1, single buffered']
    #allocation7 [shape = 's32[1]{0}', space=sflag, size = 0x4, scoped, tag = 'scoped memory for tpu_custom_call.1']
    #allocation8 [shape = 'u8[32768]{0}', space=vmem, size = 0x8000, scoped, tag = 'input window, operand 3, single buffered']
    #allocation9 [shape = 'u8[32768]{0}', space=vmem, size = 0x8000, scoped, tag = 'output window, operand 0, single buffered']
    %9 = vsyncpa [#allocation4], 0
    %10 = vsyncpa [#allocation7], 0
    %11 = vsyncpa [#allocation5], 0
    // Predicated region
    $region2: #{tpu_custom_call.1} parent=1 // pred_check
      _
    $region3: #{tpu_custom_call.1} parent=1 // pred_check_branch
      %13 = sbr.rel (0) target = $region5
    $region4: #{tpu_custom_call.1} parent=1 // pred_region
      %s15 = ssub.s32 1024, 1024
      %16 = vsyncadd [#allocation4], %s15
      %s17 = sshll.u32 [#allocation3], 4
      %s18 = int_to_ptr.vmem [resolvable:$true] %s17
      %23 = dma.hbm_to_vmem [thread:$0]  %s0, 1024, %s18, [#allocation4], 64, 64, 4
    $region5: #{tpu_custom_call.1} parent=1 // pred_fallthru
      _
    // Predicated region
    $region6: #{tpu_custom_call.1} parent=1 // pred_check
      _
    $region7: #{tpu_custom_call.1} parent=1 // pred_check_branch
      %25 = sbr.rel (0) target = $region9
    $region8: #{tpu_custom_call.1} parent=1 // pred_region
      %s27 = ssub.s32 1024, 1024
      %28 = vsyncadd [#allocation7], %s27
      %s29 = sshll.u32 [#allocation6], 4
      %s30 = int_to_ptr.vmem [resolvable:$true] %s29
      %35 = dma.hbm_to_vmem [thread:$0]  %s1, 1024, %s30, [#allocation7], 64, 64, 4
    $region9: #{tpu_custom_call.1} parent=1 // pred_fallthru
      _
    // Predicated region
    $region10: #{tpu_custom_call.1} parent=1 // pred_check
      _
    $region11: #{tpu_custom_call.1} parent=1 // pred_check_branch
      %37 = sbr.rel (0) target = $region13
    $region12: #{tpu_custom_call.1} parent=1 // pred_region
      _
    $region13: #{tpu_custom_call.1} parent=1 // pred_fallthru
      _
    // Predicated region
    $region14: #{tpu_custom_call.1} parent=1 // pred_check
      _
    $region15: #{tpu_custom_call.1} parent=1 // pred_check_branch
      %39 = sbr.rel (0) target = $region17
    $region16: #{tpu_custom_call.1} parent=1 // pred_region
      %s41 = ssub.s32 1024, 1024
      %42 = vsyncadd [#allocation7], %s41
      %s43 = sshll.u32 [#allocation8], 4
      %s44 = int_to_ptr.vmem [resolvable:$true] %s43
      %49 = dma.hbm_to_vmem [thread:$0]  %s3, 1024, %s44, [#allocation7], 64, 64, 4
    $region17: #{tpu_custom_call.1} parent=1 // pred_fallthru
      _
    // Predicated region
    $region18: #{tpu_custom_call.1} parent=1 // pred_check
      _
    $region19: #{tpu_custom_call.1} parent=1 // pred_check_branch
      %51 = sbr.rel (0) target = $region21
    $region20: #{tpu_custom_call.1} parent=1 // pred_region
      %52 = dma.done [#allocation4], 1024
    $region21: #{tpu_custom_call.1} parent=1 // pred_fallthru
      _
    // Predicated region
    $region22: #{tpu_custom_call.1} parent=1 // pred_check
      _
    $region23: #{tpu_custom_call.1} parent=1 // pred_check_branch
      %54 = sbr.rel (0) target = $region25
    $region24: #{tpu_custom_call.1} parent=1 // pred_region
      %55 = dma.done [#allocation7], 1024
    $region25: #{tpu_custom_call.1} parent=1 // pred_fallthru
      _
    // Predicated region
    $region26: #{tpu_custom_call.1} parent=1 // pred_check
      _
    $region27: #{tpu_custom_call.1} parent=1 // pred_check_branch
      %57 = sbr.rel (0) target = $region29
    $region28: #{tpu_custom_call.1} parent=1 // pred_region
      %58 = dma.done [#allocation7], 1024
    $region29: #{tpu_custom_call.1} parent=1 // pred_fallthru
      _
    %p60 = scmp.eq.s32.totalorder 0, 0
    // Predicated region
    $region30: #{tpu_custom_call.1} parent=1 // pred_check
      %p61 = pneg %p60
    $region31: #{tpu_custom_call.1} parent=1 // pred_check_branch
      %63 = sbr.rel (%p61) target = $region33
    $region32: #{tpu_custom_call.1} parent=1 // pred_region
      %64 = vst [vmem:[#allocation2] sm:$0xff] 0.0
      %65 = vst [vmem:[#allocation2 + $0x8] sm:$0xff] 0.0
      %66 = vst [vmem:[#allocation2 + $0x10] sm:$0xff] 0.0
      %67 = vst [vmem:[#allocation2 + $0x18] sm:$0xff] 0.0
      %68 = vst [vmem:[#allocation2 + $0x20] sm:$0xff] 0.0
      %69 = vst [vmem:[#allocation2 + $0x28] sm:$0xff] 0.0
      %70 = vst [vmem:[#allocation2 + $0x30] sm:$0xff] 0.0
      %71 = vst [vmem:[#allocation2 + $0x38] sm:$0xff] 0.0
      %72 = vst [vmem:[#allocation2 + $0x40] sm:$0xff] 0.0
      %73 = vst [vmem:[#allocation2 + $0x48] sm:$0xff] 0.0
      %74 = vst [vmem:[#allocation2 + $0x50] sm:$0xff] 0.0
      %75 = vst [vmem:[#allocation2 + $0x58] sm:$0xff] 0.0
      %76 = vst [vmem:[#allocation2 + $0x60] sm:$0xff] 0.0
      %77 = vst [vmem:[#allocation2 + $0x68] sm:$0xff] 0.0
      %78 = vst [vmem:[#allocation2 + $0x70] sm:$0xff] 0.0
      %79 = vst [vmem:[#allocation2 + $0x78] sm:$0xff] 0.0
    $region33: #{tpu_custom_call.1} parent=1 // pred_fallthru
      _
    %s80 = smul.u32 0, 128
    %s81 = sshra.s32 %s80, 3
    %s82 = sand.u32 %s80, 7
    %s83 = smul.addr %s81, 4
    %s84 = scalar_lea.vmem [#allocation6], %s83
    %v85 = vld [vmem:[%s84] sm:$0xf]
    %v86 = vld [vmem:[%s84 + $0x4] sm:$0xf]
    %v87 = vld [vmem:[%s84 + $0x8] sm:$0xf]
    %v88 = vld [vmem:[%s84 + $0xc] sm:$0xf]
    %v89 = vld [vmem:[%s84 + $0x10] sm:$0xf]
    %v90 = vld [vmem:[%s84 + $0x14] sm:$0xf]
    %v91 = vld [vmem:[%s84 + $0x18] sm:$0xf]
    %v92 = vld [vmem:[%s84 + $0x1c] sm:$0xf]
    %v93 = vld [vmem:[%s84 + $0x20] sm:$0xf]
    %v94 = vld [vmem:[%s84 + $0x24] sm:$0xf]
    %v95 = vld [vmem:[%s84 + $0x28] sm:$0xf]
    %v96 = vld [vmem:[%s84 + $0x2c] sm:$0xf]
    %v97 = vld [vmem:[%s84 + $0x30] sm:$0xf]
    %v98 = vld [vmem:[%s84 + $0x34] sm:$0xf]
    %v99 = vld [vmem:[%s84 + $0x38] sm:$0xf]
    %v100 = vld [vmem:[%s84 + $0x3c] sm:$0xf]
    %v101 = vld [vmem:[#allocation2] sm:$0xff]
    %v102 = vld [vmem:[#allocation2 + $0x8] sm:$0xff]
    %v103 = vld [vmem:[#allocation2 + $0x10] sm:$0xff]
    %v104 = vld [vmem:[#allocation2 + $0x18] sm:$0xff]
    %v105 = vld [vmem:[#allocation2 + $0x20] sm:$0xff]
    %v106 = vld [vmem:[#allocation2 + $0x28] sm:$0xff]
    %v107 = vld [vmem:[#allocation2 + $0x30] sm:$0xff]
    %v108 = vld [vmem:[#allocation2 + $0x38] sm:$0xff]
    %v109 = vld [vmem:[#allocation2 + $0x40] sm:$0xff]
    %v110 = vld [vmem:[#allocation2 + $0x48] sm:$0xff]
    %v111 = vld [vmem:[#allocation2 + $0x50] sm:$0xff]
    %v112 = vld [vmem:[#allocation2 + $0x58] sm:$0xff]
    %v113 = vld [vmem:[#allocation2 + $0x60] sm:$0xff]
    %v114 = vld [vmem:[#allocation2 + $0x68] sm:$0xff]
    %v115 = vld [vmem:[#allocation2 + $0x70] sm:$0xff]
    %v116 = vld [vmem:[#allocation2 + $0x78] sm:$0xff]
    %v117 = vld [vmem:[#allocation3] sm:$0xf]
    %v118 = vld [vmem:[#allocation3 + $0x4] sm:$0xf]
    %v119 = vld [vmem:[#allocation3 + $0x8] sm:$0xf]
    %v120 = vld [vmem:[#allocation3 + $0xc] sm:$0xf]
    %v121 = vld [vmem:[#allocation3 + $0x10] sm:$0xf]
    %v122 = vld [vmem:[#allocation3 + $0x14] sm:$0xf]
    %v123 = vld [vmem:[#allocation3 + $0x18] sm:$0xf]
    %v124 = vld [vmem:[#allocation3 + $0x1c] sm:$0xf]
    %v125 = vld [vmem:[#allocation3 + $0x20] sm:$0xf]
    %v126 = vld [vmem:[#allocation3 + $0x24] sm:$0xf]
    %v127 = vld [vmem:[#allocation3 + $0x28] sm:$0xf]
    %v128 = vld [vmem:[#allocation3 + $0x2c] sm:$0xf]
    %v129 = vld [vmem:[#allocation3 + $0x30] sm:$0xf]
    %v130 = vld [vmem:[#allocation3 + $0x34] sm:$0xf]
    %v131 = vld [vmem:[#allocation3 + $0x38] sm:$0xf]
    %v132 = vld [vmem:[#allocation3 + $0x3c] sm:$0xf]
    %v149 = vunpack.c.l.b16 %v117
    %v150 = vunpack.c.l.b16 %v118
    %v151 = vunpack.c.l.b16 %v119
    %v152 = vunpack.c.l.b16 %v120
    %v153 = vunpack.c.l.b16 %v121
    %v154 = vunpack.c.l.b16 %v122
    %v155 = vunpack.c.l.b16 %v123
    %v156 = vunpack.c.l.b16 %v124
    %v157 = vunpack.c.l.b16 %v125
    %v158 = vunpack.c.l.b16 %v126
    %v159 = vunpack.c.l.b16 %v127
    %v160 = vunpack.c.l.b16 %v128
    %v161 = vunpack.c.l.b16 %v129
    %v162 = vunpack.c.l.b16 %v130
    %v163 = vunpack.c.l.b16 %v131
    %v164 = vunpack.c.l.b16 %v132
    %v165 = vpack.c.b16 %v150, %v149
    %v166 = vpack.c.b16 %v152, %v151
    %v167 = vpack.c.b16 %v154, %v153
    %v168 = vpack.c.b16 %v156, %v155
    %v169 = vpack.c.b16 %v158, %v157
    %v170 = vpack.c.b16 %v160, %v159
    %v171 = vpack.c.b16 %v162, %v161
    %v172 = vpack.c.b16 %v164, %v163
    %v197 = vunpack.c.l.b16 %v85
    %v198 = vunpack.c.l.b16 %v86
    %v199 = vunpack.c.l.b16 %v87
    %v200 = vunpack.c.l.b16 %v88
    %v201 = vunpack.c.l.b16 %v89
    %v202 = vunpack.c.l.b16 %v90
    %v203 = vunpack.c.l.b16 %v91
    %v204 = vunpack.c.l.b16 %v92
    %v205 = vunpack.c.l.b16 %v93
    %v206 = vunpack.c.l.b16 %v94
    %v207 = vunpack.c.l.b16 %v95
    %v208 = vunpack.c.l.b16 %v96
    %v209 = vunpack.c.l.b16 %v97
    %v210 = vunpack.c.l.b16 %v98
    %v211 = vunpack.c.l.b16 %v99
    %v212 = vunpack.c.l.b16 %v100
    %v213 = vpack.c.b16 %v198, %v197
    %v214 = vpack.c.b16 %v200, %v199
    %v215 = vpack.c.b16 %v202, %v201
    %v216 = vpack.c.b16 %v204, %v203
    %v217 = vpack.c.b16 %v206, %v205
    %v218 = vpack.c.b16 %v208, %v207
    %v219 = vpack.c.b16 %v210, %v209
    %v220 = vpack.c.b16 %v212, %v211
    %229 = vmatprep.subr.bf16.mxu0 0
    %230 = vmatpush1.bf16.msra.mxu0 %v213
    %231 = vmatprep.subr.bf16.mxu0 0
    %232 = vmatpush1.bf16.msra.mxu0 %v214
    %233 = vmatprep.subr.bf16.mxu0 0
    %234 = vmatpush1.bf16.msra.mxu0 %v215
    %235 = vmatprep.subr.bf16.mxu0 0
    %236 = vmatpush1.bf16.msra.mxu0 %v216
    %237 = vmatprep.subr.bf16.mxu0 0
    %238 = vmatpush1.bf16.msra.mxu0 %v217
    %239 = vmatprep.subr.bf16.mxu0 0
    %240 = vmatpush1.bf16.msra.mxu0 %v218
    %241 = vmatprep.subr.bf16.mxu0 0
    %242 = vmatpush1.bf16.msra.mxu0 %v219
    %243 = vmatprep.subr.bf16.mxu0 0
    %244 = vmatpush1.bf16.msra.mxu0 %v220
    %245 = vmatprep.subr.bf16.mxu0 0
    %246 = vmatpush1.bf16.msra.mxu0 0
    %247 = vmatprep.subr.bf16.mxu0 0
    %248 = vmatpush1.bf16.msra.mxu0 0
    %249 = vmatprep.subr.bf16.mxu0 0
    %250 = vmatpush1.bf16.msra.mxu0 0
    %251 = vmatprep.subr.bf16.mxu0 0
    %252 = vmatpush1.bf16.msra.mxu0 0
    %253 = vmatprep.subr.bf16.mxu0 0
    %254 = vmatpush1.bf16.msra.mxu0 0
    %255 = vmatprep.subr.bf16.mxu0 0
    %256 = vmatpush1.bf16.msra.mxu0 0
    %257 = vmatprep.subr.bf16.mxu0 0
    %258 = vmatpush1.bf16.msra.mxu0 0
    %259 = vmatprep.subr.bf16.mxu0 0
    %260 = vmatpush1.bf16.msra.mxu0 0
    %261 = vmatprep.mubr.bf16.mxu0 0
    %262 = vmatmul.mubr.bf16.gmra.mrb[0].mxu0 %v165
    %v263 = vpop.f32.mrb[0].mxu0
    %v264 = vadd.f32 0.0, %v263
    %v265 = vpop.f32.mrb[0].mxu0
    %v266 = vpop.f32.mrb[0].mxu0
    %v267 = vadd.f32 0.0, %v266
    %v268 = vpop.f32.mrb[0].mxu0
    %269 = vmatprep.mubr.bf16.mxu0 0
    %270 = vmatmul.mubr.bf16.gmra.mrb[0].mxu0 %v166
    %v271 = vpop.f32.mrb[0].mxu0
    %v272 = vadd.f32 0.0, %v271
    %v273 = vpop.f32.mrb[0].mxu0
    %v274 = vpop.f32.mrb[0].mxu0
    %v275 = vadd.f32 0.0, %v274
    %v276 = vpop.f32.mrb[0].mxu0
    %277 = vmatprep.mubr.bf16.mxu0 0
    %278 = vmatmul.mubr.bf16.gmra.mrb[0].mxu0 %v167
    %v279 = vpop.f32.mrb[0].mxu0
    %v280 = vadd.f32 0.0, %v279
    %v281 = vpop.f32.mrb[0].mxu0
    %v282 = vpop.f32.mrb[0].mxu0
    %v283 = vadd.f32 0.0, %v282
    %v284 = vpop.f32.mrb[0].mxu0
    %285 = vmatprep.mubr.bf16.mxu0 0
    %286 = vmatmul.mubr.bf16.gmra.mrb[0].mxu0 %v168
    %v287 = vpop.f32.mrb[0].mxu0
    %v288 = vadd.f32 0.0, %v287
    %v289 = vpop.f32.mrb[0].mxu0
    %v290 = vpop.f32.mrb[0].mxu0
    %v291 = vadd.f32 0.0, %v290
    %v292 = vpop.f32.mrb[0].mxu0
    %293 = vmatprep.mubr.bf16.mxu0 0
    %294 = vmatmul.mubr.bf16.gmra.mrb[0].mxu0 %v169
    %v295 = vpop.f32.mrb[0].mxu0
    %v296 = vadd.f32 0.0, %v295
    %v297 = vpop.f32.mrb[0].mxu0
    %v298 = vpop.f32.mrb[0].mxu0
    %v299 = vadd.f32 0.0, %v298
    %v300 = vpop.f32.mrb[0].mxu0
    %301 = vmatprep.mubr.bf16.mxu0 0
    %302 = vmatmul.mubr.bf16.gmra.mrb[0].mxu0 %v170
    %v303 = vpop.f32.mrb[0].mxu0
    %v304 = vadd.f32 0.0, %v303
    %v305 = vpop.f32.mrb[0].mxu0
    %v306 = vpop.f32.mrb[0].mxu0
    %v307 = vadd.f32 0.0, %v306
    %v308 = vpop.f32.mrb[0].mxu0
    %309 = vmatprep.mubr.bf16.mxu0 0
    %310 = vmatmul.mubr.bf16.gmra.mrb[0].mxu0 %v171
    %v311 = vpop.f32.mrb[0].mxu0
    %v312 = vadd.f32 0.0, %v311
    %v313 = vpop.f32.mrb[0].mxu0
    %v314 = vpop.f32.mrb[0].mxu0
    %v315 = vadd.f32 0.0, %v314
    %v316 = vpop.f32.mrb[0].mxu0
    %317 = vmatprep.mubr.bf16.mxu0 0
    %318 = vmatmul.mubr.bf16.gmra.mrb[0].mxu0 %v172
    %v319 = vpop.f32.mrb[0].mxu0
    %v320 = vadd.f32 0.0, %v319
    %v321 = vpop.f32.mrb[0].mxu0
    %v322 = vpop.f32.mrb[0].mxu0
    %v323 = vadd.f32 0.0, %v322
    %v324 = vpop.f32.mrb[0].mxu0
    %325 = vdwg.mxu0
    %v326 = vadd.f32 %v101, %v264
    %v327 = vadd.f32 %v102, %v267
    %v328 = vadd.f32 %v103, %v272
    %v329 = vadd.f32 %v104, %v275
    %v330 = vadd.f32 %v105, %v280
    %v331 = vadd.f32 %v106, %v283
    %v332 = vadd.f32 %v107, %v288
    %v333 = vadd.f32 %v108, %v291
    %v334 = vadd.f32 %v109, %v296
    %v335 = vadd.f32 %v110, %v299
    %v336 = vadd.f32 %v111, %v304
    %v337 = vadd.f32 %v112, %v307
    %v338 = vadd.f32 %v113, %v312
    %v339 = vadd.f32 %v114, %v315
    %v340 = vadd.f32 %v115, %v320
    %v341 = vadd.f32 %v116, %v323
    %342 = vst [vmem:[#allocation2] sm:$0xff] %v326
    %343 = vst [vmem:[#allocation2 + $0x8] sm:$0xff] %v327
    %344 = vst [vmem:[#allocation2 + $0x10] sm:$0xff] %v328
    %345 = vst [vmem:[#allocation2 + $0x18] sm:$0xff] %v329
    %346 = vst [vmem:[#allocation2 + $0x20] sm:$0xff] %v330
    %347 = vst [vmem:[#allocation2 + $0x28] sm:$0xff] %v331
    %348 = vst [vmem:[#allocation2 + $0x30] sm:$0xff] %v332
    %349 = vst [vmem:[#allocation2 + $0x38] sm:$0xff] %v333
    %350 = vst [vmem:[#allocation2 + $0x40] sm:$0xff] %v334
    %351 = vst [vmem:[#allocation2 + $0x48] sm:$0xff] %v335
    %352 = vst [vmem:[#allocation2 + $0x50] sm:$0xff] %v336
    %353 = vst [vmem:[#allocation2 + $0x58] sm:$0xff] %v337
    %354 = vst [vmem:[#allocation2 + $0x60] sm:$0xff] %v338
    %355 = vst [vmem:[#allocation2 + $0x68] sm:$0xff] %v339
    %356 = vst [vmem:[#allocation2 + $0x70] sm:$0xff] %v340
    %357 = vst [vmem:[#allocation2 + $0x78] sm:$0xff] %v341
    // Predicated region
    $region34: #{tpu_custom_call.1} parent=1 // pred_check
      %p358 = pneg %p60
    $region35: #{tpu_custom_call.1} parent=1 // pred_check_branch
      %360 = sbr.rel (%p358) target = $region37
    $region36: #{tpu_custom_call.1} parent=1 // pred_region
      %v361 = vld [vmem:[#allocation2] sm:$0xff]
      %v362 = vld [vmem:[#allocation2 + $0x8] sm:$0xff]
      %v363 = vld [vmem:[#allocation2 + $0x10] sm:$0xff]
      %v364 = vld [vmem:[#allocation2 + $0x18] sm:$0xff]
      %v365 = vld [vmem:[#allocation2 + $0x20] sm:$0xff]
      %v366 = vld [vmem:[#allocation2 + $0x28] sm:$0xff]
      %v367 = vld [vmem:[#allocation2 + $0x30] sm:$0xff]
      %v368 = vld [vmem:[#allocation2 + $0x38] sm:$0xff]
      %v369 = vld [vmem:[#allocation2 + $0x40] sm:$0xff]
      %v370 = vld [vmem:[#allocation2 + $0x48] sm:$0xff]
      %v371 = vld [vmem:[#allocation2 + $0x50] sm:$0xff]
      %v372 = vld [vmem:[#allocation2 + $0x58] sm:$0xff]
      %v373 = vld [vmem:[#allocation2 + $0x60] sm:$0xff]
      %v374 = vld [vmem:[#allocation2 + $0x68] sm:$0xff]
      %v375 = vld [vmem:[#allocation2 + $0x70] sm:$0xff]
      %v376 = vld [vmem:[#allocation2 + $0x78] sm:$0xff]
      %v377 = vld [vmem:[%s2] sm:$0x1]
      %v379 = vlaneseq
      %v380 = vshrl.u32 %v379, 7
      %v381 = vsub.s32 0, %v380
      %v382 = vrot.slane %v377, %v381
      %v384 = vadd.f32 %v361, %v382
      %v385 = vadd.f32 %v362, %v382
      %v386 = vadd.f32 %v363, %v382
      %v387 = vadd.f32 %v364, %v382
      %v388 = vadd.f32 %v365, %v382
      %v389 = vadd.f32 %v366, %v382
      %v390 = vadd.f32 %v367, %v382
      %v391 = vadd.f32 %v368, %v382
      %v392 = vadd.f32 %v369, %v382
      %v393 = vadd.f32 %v370, %v382
      %v394 = vadd.f32 %v371, %v382
      %v395 = vadd.f32 %v372, %v382
      %v396 = vadd.f32 %v373, %v382
      %v397 = vadd.f32 %v374, %v382
      %v398 = vadd.f32 %v375, %v382
      %v399 = vadd.f32 %v376, %v382
      %v400 = vmax.f32 %v384, 0.0
      %v401 = vmax.f32 %v385, 0.0
      %v402 = vmax.f32 %v386, 0.0
      %v403 = vmax.f32 %v387, 0.0
      %v404 = vmax.f32 %v388, 0.0
      %v405 = vmax.f32 %v389, 0.0
      %v406 = vmax.f32 %v390, 0.0
      %v407 = vmax.f32 %v391, 0.0
      %v408 = vmax.f32 %v392, 0.0
      %v409 = vmax.f32 %v393, 0.0
      %v410 = vmax.f32 %v394, 0.0
      %v411 = vmax.f32 %v395, 0.0
      %v412 = vmax.f32 %v396, 0.0
      %v413 = vmax.f32 %v397, 0.0
      %v414 = vmax.f32 %v398, 0.0
      %v415 = vmax.f32 %v399, 0.0
      %v416 = vpack.c.bf16 %v401, %v400
      %v417 = vpack.c.bf16 %v403, %v402
      %v418 = vpack.c.bf16 %v405, %v404
      %v419 = vpack.c.bf16 %v407, %v406
      %v420 = vpack.c.bf16 %v409, %v408
      %v421 = vpack.c.bf16 %v411, %v410
      %v422 = vpack.c.bf16 %v413, %v412
      %v423 = vpack.c.bf16 %v415, %v414
      %v424 = vld [vmem:[#allocation8] sm:$0xf]
      %v425 = vld [vmem:[#allocation8 + $0x4] sm:$0xf]
      %v426 = vld [vmem:[#allocation8 + $0x8] sm:$0xf]
      %v427 = vld [vmem:[#allocation8 + $0xc] sm:$0xf]
      %v428 = vld [vmem:[#allocation8 + $0x10] sm:$0xf]
      %v429 = vld [vmem:[#allocation8 + $0x14] sm:$0xf]
      %v430 = vld [vmem:[#allocation8 + $0x18] sm:$0xf]
      %v431 = vld [vmem:[#allocation8 + $0x1c] sm:$0xf]
      %v432 = vld [vmem:[#allocation8 + $0x20] sm:$0xf]
      %v433 = vld [vmem:[#allocation8 + $0x24] sm:$0xf]
      %v434 = vld [vmem:[#allocation8 + $0x28] sm:$0xf]
      %v435 = vld [vmem:[#allocation8 + $0x2c] sm:$0xf]
      %v436 = vld [vmem:[#allocation8 + $0x30] sm:$0xf]
      %v437 = vld [vmem:[#allocation8 + $0x34] sm:$0xf]
      %v438 = vld [vmem:[#allocation8 + $0x38] sm:$0xf]
      %v439 = vld [vmem:[#allocation8 + $0x3c] sm:$0xf]
      %v456 = vunpack.c.l.b16 %v424
      %v457 = vunpack.c.l.b16 %v425
      %v458 = vunpack.c.l.b16 %v426
      %v459 = vunpack.c.l.b16 %v427
      %v460 = vunpack.c.l.b16 %v428
      %v461 = vunpack.c.l.b16 %v429
      %v462 = vunpack.c.l.b16 %v430
      %v463 = vunpack.c.l.b16 %v431
      %v464 = vunpack.c.l.b16 %v432
      %v465 = vunpack.c.l.b16 %v433
      %v466 = vunpack.c.l.b16 %v434
      %v467 = vunpack.c.l.b16 %v435
      %v468 = vunpack.c.l.b16 %v436
      %v469 = vunpack.c.l.b16 %v437
      %v470 = vunpack.c.l.b16 %v438
      %v471 = vunpack.c.l.b16 %v439
      %v472 = vpack.c.b16 %v457, %v456
      %v473 = vpack.c.b16 %v459, %v458
      %v474 = vpack.c.b16 %v461, %v460
      %v475 = vpack.c.b16 %v463, %v462
      %v476 = vpack.c.b16 %v465, %v464
      %v477 = vpack.c.b16 %v467, %v466
      %v478 = vpack.c.b16 %v469, %v468
      %v479 = vpack.c.b16 %v471, %v470
      %488 = vmatprep.subr.bf16.mxu0 0
      %489 = vmatpush1.bf16.msra.mxu0 %v472
      %490 = vmatprep.subr.bf16.mxu0 0
      %491 = vmatpush1.bf16.msra.mxu0 %v473
      %492 = vmatprep.subr.bf16.mxu0 0
      %493 = vmatpush1.bf16.msra.mxu0 %v474
      %494 = vmatprep.subr.bf16.mxu0 0
      %495 = vmatpush1.bf16.msra.mxu0 %v475
      %496 = vmatprep.subr.bf16.mxu0 0
      %497 = vmatpush1.bf16.msra.mxu0 %v476
      %498 = vmatprep.subr.bf16.mxu0 0
      %499 = vmatpush1.bf16.msra.mxu0 %v477
      %500 = vmatprep.subr.bf16.mxu0 0
      %501 = vmatpush1.bf16.msra.mxu0 %v478
      %502 = vmatprep.subr.bf16.mxu0 0
      %503 = vmatpush1.bf16.msra.mxu0 %v479
      %504 = vmatprep.subr.bf16.mxu0 0
      %505 = vmatpush1.bf16.msra.mxu0 0
      %506 = vmatprep.subr.bf16.mxu0 0
      %507 = vmatpush1.bf16.msra.mxu0 0
      %508 = vmatprep.subr.bf16.mxu0 0
      %509 = vmatpush1.bf16.msra.mxu0 0
      %510 = vmatprep.subr.bf16.mxu0 0
      %511 = vmatpush1.bf16.msra.mxu0 0
      %512 = vmatprep.subr.bf16.mxu0 0
      %513 = vmatpush1.bf16.msra.mxu0 0
      %514 = vmatprep.subr.bf16.mxu0 0
      %515 = vmatpush1.bf16.msra.mxu0 0
      %516 = vmatprep.subr.bf16.mxu0 0
      %517 = vmatpush1.bf16.msra.mxu0 0
      %518 = vmatprep.subr.bf16.mxu0 0
      %519 = vmatpush1.bf16.msra.mxu0 0
      %520 = vmatprep.mubr.bf16.mxu0 0
      %521 = vmatmul.mubr.bf16.gmra.mrb[0].mxu0 %v416
      %v522 = vpop.f32.mrb[0].mxu0
      %v523 = vadd.f32 0.0, %v522
      %v524 = vpop.f32.mrb[0].mxu0
      %v525 = vpop.f32.mrb[0].mxu0
      %v526 = vadd.f32 0.0, %v525
      %v527 = vpop.f32.mrb[0].mxu0
      %528 = vmatprep.mubr.bf16.mxu0 0
      %529 = vmatmul.mubr.bf16.gmra.mrb[0].mxu0 %v417
      %v530 = vpop.f32.mrb[0].mxu0
      %v531 = vadd.f32 0.0, %v530
      %v532 = vpop.f32.mrb[0].mxu0
      %v533 = vpop.f32.mrb[0].mxu0
      %v534 = vadd.f32 0.0, %v533
      %v535 = vpop.f32.mrb[0].mxu0
      %536 = vmatprep.mubr.bf16.mxu0 0
      %537 = vmatmul.mubr.bf16.gmra.mrb[0].mxu0 %v418
      %v538 = vpop.f32.mrb[0].mxu0
      %v539 = vadd.f32 0.0, %v538
      %v540 = vpop.f32.mrb[0].mxu0
      %v541 = vpop.f32.mrb[0].mxu0
      %v542 = vadd.f32 0.0, %v541
      %v543 = vpop.f32.mrb[0].mxu0
      %544 = vmatprep.mubr.bf16.mxu0 0
      %545 = vmatmul.mubr.bf16.gmra.mrb[0].mxu0 %v419
      %v546 = vpop.f32.mrb[0].mxu0
      %v547 = vadd.f32 0.0, %v546
      %v548 = vpop.f32.mrb[0].mxu0
      %v549 = vpop.f32.mrb[0].mxu0
      %v550 = vadd.f32 0.0, %v549
      %v551 = vpop.f32.mrb[0].mxu0
      %552 = vmatprep.mubr.bf16.mxu0 0
      %553 = vmatmul.mubr.bf16.gmra.mrb[0].mxu0 %v420
      %v554 = vpop.f32.mrb[0].mxu0
      %v555 = vadd.f32 0.0, %v554
      %v556 = vpop.f32.mrb[0].mxu0
      %v557 = vpop.f32.mrb[0].mxu0
      %v558 = vadd.f32 0.0, %v557
      %v559 = vpop.f32.mrb[0].mxu0
      %560 = vmatprep.mubr.bf16.mxu0 0
      %561 = vmatmul.mubr.bf16.gmra.mrb[0].mxu0 %v421
      %v562 = vpop.f32.mrb[0].mxu0
      %v563 = vadd.f32 0.0, %v562
      %v564 = vpop.f32.mrb[0].mxu0
      %v565 = vpop.f32.mrb[0].mxu0
      %v566 = vadd.f32 0.0, %v565
      %v567 = vpop.f32.mrb[0].mxu0
      %568 = vmatprep.mubr.bf16.mxu0 0
      %569 = vmatmul.mubr.bf16.gmra.mrb[0].mxu0 %v422
      %v570 = vpop.f32.mrb[0].mxu0
      %v571 = vadd.f32 0.0, %v570
      %v572 = vpop.f32.mrb[0].mxu0
      %v573 = vpop.f32.mrb[0].mxu0
      %v574 = vadd.f32 0.0, %v573
      %v575 = vpop.f32.mrb[0].mxu0
      %576 = vmatprep.mubr.bf16.mxu0 0
      %577 = vmatmul.mubr.bf16.gmra.mrb[0].mxu0 %v423
      %v578 = vpop.f32.mrb[0].mxu0
      %v579 = vadd.f32 0.0, %v578
      %v580 = vpop.f32.mrb[0].mxu0
      %v581 = vpop.f32.mrb[0].mxu0
      %v582 = vadd.f32 0.0, %v581
      %v583 = vpop.f32.mrb[0].mxu0
      %584 = vdwg.mxu0
      %v585 = vpack.c.bf16 %v526, %v523
      %v586 = vpack.c.bf16 %v534, %v531
      %v587 = vpack.c.bf16 %v542, %v539
      %v588 = vpack.c.bf16 %v550, %v547
      %v589 = vpack.c.bf16 %v558, %v555
      %v590 = vpack.c.bf16 %v566, %v563
      %v591 = vpack.c.bf16 %v574, %v571
      %v592 = vpack.c.bf16 %v582, %v579
      %v601 = vunpack.c.l.b16 %v585
      %v602 = vunpack.c.h.b16 %v585
      %v603 = vunpack.c.l.b16 %v586
      %v604 = vunpack.c.h.b16 %v586
      %v605 = vunpack.c.l.b16 %v587
      %v606 = vunpack.c.h.b16 %v587
      %v607 = vunpack.c.l.b16 %v588
      %v608 = vunpack.c.h.b16 %v588
      %v609 = vunpack.c.l.b16 %v589
      %v610 = vunpack.c.h.b16 %v589
      %v611 = vunpack.c.l.b16 %v590
      %v612 = vunpack.c.h.b16 %v590
      %v613 = vunpack.c.l.b16 %v591
      %v614 = vunpack.c.h.b16 %v591
      %v615 = vunpack.c.l.b16 %v592
      %v616 = vunpack.c.h.b16 %v592
      %v617 = vpack.c.b16 %v601, %v601
      %v618 = vpack.c.b16 %v602, %v602
      %v619 = vpack.c.b16 %v603, %v603
      %v620 = vpack.c.b16 %v604, %v604
      %v621 = vpack.c.b16 %v605, %v605
      %v622 = vpack.c.b16 %v606, %v606
      %v623 = vpack.c.b16 %v607, %v607
      %v624 = vpack.c.b16 %v608, %v608
      %v625 = vpack.c.b16 %v609, %v609
      %v626 = vpack.c.b16 %v610, %v610
      %v627 = vpack.c.b16 %v611, %v611
      %v628 = vpack.c.b16 %v612, %v612
      %v629 = vpack.c.b16 %v613, %v613
      %v630 = vpack.c.b16 %v614, %v614
      %v631 = vpack.c.b16 %v615, %v615
      %v632 = vpack.c.b16 %v616, %v616
      %649 = vst [vmem:[#allocation9] sm:$0xf] %v617
      %650 = vst [vmem:[#allocation9 + $0x4] sm:$0xf] %v618
      %651 = vst [vmem:[#allocation9 + $0x8] sm:$0xf] %v619
      %652 = vst [vmem:[#allocation9 + $0xc] sm:$0xf] %v620
      %653 = vst [vmem:[#allocation9 + $0x10] sm:$0xf] %v621
      %654 = vst [vmem:[#allocation9 + $0x14] sm:$0xf] %v622
      %655 = vst [vmem:[#allocation9 + $0x18] sm:$0xf] %v623
      %656 = vst [vmem:[#allocation9 + $0x1c] sm:$0xf] %v624
      %657 = vst [vmem:[#allocation9 + $0x20] sm:$0xf] %v625
      %658 = vst [vmem:[#allocation9 + $0x24] sm:$0xf] %v626
      %659 = vst [vmem:[#allocation9 + $0x28] sm:$0xf] %v627
      %660 = vst [vmem:[#allocation9 + $0x2c] sm:$0xf] %v628
      %661 = vst [vmem:[#allocation9 + $0x30] sm:$0xf] %v629
      %662 = vst [vmem:[#allocation9 + $0x34] sm:$0xf] %v630
      %663 = vst [vmem:[#allocation9 + $0x38] sm:$0xf] %v631
      %664 = vst [vmem:[#allocation9 + $0x3c] sm:$0xf] %v632
    $region37: #{tpu_custom_call.1} parent=1 // pred_fallthru
      _
    // Predicated region
    $region38: #{tpu_custom_call.1} parent=1 // pred_check
      _
    $region39: #{tpu_custom_call.1} parent=1 // pred_check_branch
      %666 = sbr.rel (0) target = $region41
    $region40: #{tpu_custom_call.1} parent=1 // pred_region
      %s668 = ssub.s32 1024, 1024
      %669 = vsyncadd [#allocation5], %s668
      %s670 = sshll.u32 [#allocation9], 4
      %s671 = int_to_ptr.vmem [resolvable:$true] %s670
      %676 = dma.vmem_to_hbm [thread:$0]  %s671, 1024, %s4, [#allocation5], 64, 64, 4
    $region41: #{tpu_custom_call.1} parent=1 // pred_fallthru
      _
    // Predicated region
    $region42: #{tpu_custom_call.1} parent=1 // pred_check
      _
    $region43: #{tpu_custom_call.1} parent=1 // pred_check_branch
      %678 = sbr.rel (0) target = $region45
    $region44: #{tpu_custom_call.1} parent=1 // pred_region
      %679 = dma.done [#allocation5], 1024
    $region45: #{tpu_custom_call.1} parent=1 // pred_fallthru
      _
    %680 = vsyncpa [#allocation4], 1
    %681 = vsyncpa [#allocation7], 1
    %682 = vsyncpa [#allocation5], 1

</llo_original>
